<compile_context>
chip_gen: v6e
topology: v6e:2x2x1
jax: 0.10.0
libtpu: 0.0.40
codegen_flags: <defaults>
</compile_context>

<pallas_src>
import functools

import jax
import jax.numpy as jnp
from jax.experimental import pallas as pl
from jax.experimental.pallas import tpu as pltpu


def _lsgn_kernel(x_ref, w_ref, n_ref, out_ref, acc_ref, *, sigma):
    """One (tm, tn) output tile: acc += x_tile @ w_tile; last K step adds noise."""
    k = pl.program_id(2)

    @pl.when(k == 0)
    def _():
        acc_ref[...] = jnp.zeros_like(acc_ref)

    acc_ref[...] += jnp.dot(
        x_ref[...], w_ref[...], preferred_element_type=jnp.float32
    )

    @pl.when(k == pl.num_programs(2) - 1)
    def _():
        out_ref[...] = (
            acc_ref[...] + jnp.float32(sigma) * n_ref[...].astype(jnp.float32)
        ).astype(out_ref.dtype)


def _pick_tile(dim, target, mult):
    """Largest multiple of `mult` that divides `dim`, capped at `target`.

    Falls back to the full dim (always a legal block size)."""
    t = min(dim, target)
    t -= t % mult
    while t >= mult:
        if dim % t == 0:
            return t
        t -= mult
    return dim


def linear_system_plus_gaussian_noise_forward(x, A_w, key, sigma=0.1):
    """forward(x) = A(x) + sigma * w,  w ~ N(0, I), via a fused Pallas kernel.

    x   : [N, C, H, W] float32 (NCHW, matching PyTorch).
    A_w : [D, M] dense linear-system matrix with D = H*W; A(x) = x_flat @ A_w.
    key : PRNG key for the white-noise draw (torch.randn_like equivalent).
    """
    N, C, H, W = x.shape
    D = H * W
    Dw, M = A_w.shape
    assert Dw == D, "A_w must act on the flattened spatial dim (D = H*W)"
    rows = N * C

    x2d = x.reshape(rows, D)
    # White noise shaped like Ax, drawn outside the kernel (deterministic).
    noise2d = jax.random.normal(key, (rows, M), dtype=x.dtype)

    # Tile sizes: lane-dense (multiple of 128) last dims, modest VMEM footprint
    # (fits the default scoped limits on v5e/v6e and v7x's 64 MiB VMEM).
    tm = _pick_tile(rows, 256, 8)
    tk = _pick_tile(D, 512, 128)
    tn = _pick_tile(M, 512, 128)
    grid = (pl.cdiv(rows, tm), pl.cdiv(M, tn), pl.cdiv(D, tk))

    kernel = functools.partial(_lsgn_kernel, sigma=float(sigma))

    out2d = pl.pallas_call(
        kernel,
        out_shape=jax.ShapeDtypeStruct((rows, M), x.dtype),
        grid_spec=pltpu.PrefetchScalarGridSpec(
            num_scalar_prefetch=0,
            grid=grid,
            in_specs=[
                pl.BlockSpec((tm, tk), lambda i, j, k: (i, k)),  # x tile
                pl.BlockSpec((tk, tn), lambda i, j, k: (k, j)),  # A tile
                pl.BlockSpec((tm, tn), lambda i, j, k: (i, j)),  # noise tile
            ],
            out_specs=pl.BlockSpec((tm, tn), lambda i, j, k: (i, j)),
            scratch_shapes=[pltpu.VMEM((tm, tn), jnp.float32)],
        ),
        compiler_params=pltpu.CompilerParams(
            dimension_semantics=("parallel", "parallel", "arbitrary"),
        ),
    )(x2d, A_w, noise2d)

    if M == D:
        return out2d.reshape(N, C, H, W)
    return out2d.reshape(N, C, M)


if __name__ == "__main__":
    root = jax.random.PRNGKey(0)
    kx, kw, kn = jax.random.split(root, 3)

    # Small NCHW input consistent with an image-measurement model.
    N, C, H, W = 2, 4, 16, 16
    D = H * W
    sigma = 0.1

    x = jax.random.normal(kx, (N, C, H, W), dtype=jnp.float32)
    # Canonical concrete mean system response: dense linear operator on the
    # flattened spatial dim, scaled so A(x) is O(1).
    A_w = jax.random.normal(kw, (D, D), dtype=jnp.float32) / jnp.sqrt(
        jnp.float32(D)
    )

    out = linear_system_plus_gaussian_noise_forward(x, A_w, kn, sigma=sigma)
    out = jax.block_until_ready(out)

    # Pure-JAX reference using the identical noise draw.
    x2d = x.reshape(N * C, D)
    noise2d = jax.random.normal(kn, (N * C, D), dtype=jnp.float32)
    ref = (
        jnp.dot(x2d, A_w, preferred_element_type=jnp.float32)
        + sigma * noise2d
    ).reshape(N, C, H, W)

    assert out.shape == x.shape and out.dtype == x.dtype
    max_err = float(jnp.max(jnp.abs(out - ref)))
    assert jnp.allclose(out, ref, atol=2e-2, rtol=2e-2), max_err

    print("KERNEL_OK")
</pallas_src>

<mosaic_0001>
module attributes {stable_mosaic.version = 11 : i64} {
  func.func @_lsgn_kernel(%arg0: i32, %arg1: i32, %arg2: i32, %arg3: memref<8x256xf32, #tpu.memory_space<vmem>>, %arg4: memref<256x256xf32, #tpu.memory_space<vmem>>, %arg5: memref<8x256xf32, #tpu.memory_space<vmem>>, %arg6: memref<8x256xf32, #tpu.memory_space<vmem>>, %arg7: memref<8x256xf32, #tpu.memory_space<vmem>>) attributes {dimension_semantics = [#tpu.dimension_semantics<parallel>, #tpu.dimension_semantics<parallel>, #tpu.dimension_semantics<arbitrary>], iteration_bounds = array<i64: 1, 1, 1>, scalar_prefetch = 0 : i64, scratch_operands = 1 : i64, tpu.core_type = #tpu.core_type<tc>, window_params = [{transform_indices = @transform_0, window_bounds = array<i64: 8, 256>}, {transform_indices = @transform_1, window_bounds = array<i64: 256, 256>}, {transform_indices = @transform_2, window_bounds = array<i64: 8, 256>}, {transform_indices = @transform_3, window_bounds = array<i64: 8, 256>}]} {
    %c0_i32 = arith.constant 0 : i32
    %0 = arith.cmpi eq, %arg2, %c0_i32 : i32
    %1 = arith.extui %0 : i1 to i32
    %c0_i32_0 = arith.constant 0 : i32
    %2 = arith.cmpi ne, %1, %c0_i32_0 : i32
    scf.if %2 {
      %cst_10 = arith.constant 0.000000e+00 : f32
      %12 = vector.broadcast %cst_10 : f32 to vector<8x256xf32>
      %c0_11 = arith.constant 0 : index
      %c0_12 = arith.constant 0 : index
      %13 = vector.load %arg7[%c0_11, %c0_12] : memref<8x256xf32, #tpu.memory_space<vmem>>, vector<8x256xf32>
      tpu.vector_store %arg7[%c0_11, %c0_12], %12 {strides = array<i32>} : memref<8x256xf32, #tpu.memory_space<vmem>>, vector<8x256xf32>,
    } else {
    }
    %c0 = arith.constant 0 : index
    %c0_1 = arith.constant 0 : index
    %3 = vector.load %arg7[%c0, %c0_1] : memref<8x256xf32, #tpu.memory_space<vmem>>, vector<8x256xf32>
    %c0_2 = arith.constant 0 : index
    %c0_3 = arith.constant 0 : index
    %4 = vector.load %arg3[%c0_2, %c0_3] : memref<8x256xf32, #tpu.memory_space<vmem>>, vector<8x256xf32>
    %c0_4 = arith.constant 0 : index
    %c0_5 = arith.constant 0 : index
    %5 = vector.load %arg4[%c0_4, %c0_5] : memref<256x256xf32, #tpu.memory_space<vmem>>, vector<256x256xf32>
    %cst = arith.constant dense<0.000000e+00> : vector<8x256xf32>
    %6 = tpu.matmul %4, %5, %cst {dimension_numbers = #tpu.dot_dimension_numbers<[1], [0], [0], [1], [0, 0, 1, 1], [], []>} : vector<8x256xf32>, vector<256x256xf32>, vector<8x256xf32> -> vector<8x256xf32>
    %7 = arith.addf %3, %6 : vector<8x256xf32>
    %c0_6 = arith.constant 0 : index
    %c0_7 = arith.constant 0 : index
    %8 = vector.load %arg7[%c0_6, %c0_7] : memref<8x256xf32, #tpu.memory_space<vmem>>, vector<8x256xf32>
    tpu.vector_store %arg7[%c0_6, %c0_7], %7 {strides = array<i32>} : memref<8x256xf32, #tpu.memory_space<vmem>>, vector<8x256xf32>,
    %c0_i32_8 = arith.constant 0 : i32
    %9 = arith.cmpi eq, %arg2, %c0_i32_8 : i32
    %10 = arith.extui %9 : i1 to i32
    %c0_i32_9 = arith.constant 0 : i32
    %11 = arith.cmpi ne, %10, %c0_i32_9 : i32
    scf.if %11 {
      %c0_10 = arith.constant 0 : index
      %c0_11 = arith.constant 0 : index
      %12 = vector.load %arg7[%c0_10, %c0_11] : memref<8x256xf32, #tpu.memory_space<vmem>>, vector<8x256xf32>
      %c0_12 = arith.constant 0 : index
      %c0_13 = arith.constant 0 : index
      %13 = vector.load %arg5[%c0_12, %c0_13] : memref<8x256xf32, #tpu.memory_space<vmem>>, vector<8x256xf32>
      %cst_14 = arith.constant 1.000000e-01 : f32
      %14 = vector.broadcast %cst_14 : f32 to vector<8x256xf32>
      %15 = arith.mulf %14, %13 : vector<8x256xf32>
      %16 = arith.addf %12, %15 : vector<8x256xf32>
      %c0_15 = arith.constant 0 : index
      %c0_16 = arith.constant 0 : index
      %17 = vector.load %arg6[%c0_15, %c0_16] : memref<8x256xf32, #tpu.memory_space<vmem>>, vector<8x256xf32>
      tpu.vector_store %arg6[%c0_15, %c0_16], %16 {strides = array<i32>} : memref<8x256xf32, #tpu.memory_space<vmem>>, vector<8x256xf32>,
    } else {
    }
    return
  }
  func.func @transform_0(%arg0: i32, %arg1: i32, %arg2: i32) -> (i32, i32) {
    %c0_i32 = arith.constant 0 : i32
    return %arg0, %arg2 : i32, i32
  }
  func.func @transform_1(%arg0: i32, %arg1: i32, %arg2: i32) -> (i32, i32) {
    %c0_i32 = arith.constant 0 : i32
    return %arg2, %arg1 : i32, i32
  }
  func.func @transform_2(%arg0: i32, %arg1: i32, %arg2: i32) -> (i32, i32) {
    %c0_i32 = arith.constant 0 : i32
    return %arg0, %arg1 : i32, i32
  }
  func.func @transform_3(%arg0: i32, %arg1: i32, %arg2: i32) -> (i32, i32) {
    %c0_i32 = arith.constant 0 : i32
    return %arg0, %arg1 : i32, i32
  }
}

</mosaic_0001>

<llo_original>
// kernel: tpu_custom_call.1
$region0: #{tpu_custom_call.1}
  #allocation0 [shape = 'u32[]', space=smem, size = 0x4, offset = 0x4, fixed_abs, tag = 'smem constant byte address 0x4 - core index']
  #allocation1 [shape = 'u32[144,128]{1,0:T(1,128)}', space=vmem, size = 0x12000, scoped, tag = 'internal scratch']
  #allocation2 [shape = 'f32[8,256]{1,0:T(8,128)}', space=vmem, size = 0x2000, scoped, tag = 'scratch operand']
  %s0 = inlined_call_operand.hbm [shape: f32[8,256], index: 0, kind: input, shape index: {}]
  %s1 = inlined_call_operand.hbm [shape: f32[256,256], index: 1, kind: input, shape index: {}]
  %s2 = inlined_call_operand.hbm [shape: f32[8,256], index: 2, kind: input, shape index: {}]
  %s3 = inlined_call_operand.hbm [shape: f32[8,256], index: 3, kind: output, shape index: {}]
  %s4 = sld [smem:[#allocation0]]
  $region42: #{tpu_custom_call.1} parent=0
    _
  %s6 = ssub.s32 1, %s4
  %s7 = scalar_select 0, %s6, %s4
  $region1: #{tpu_custom_call.1} parent=0
    #allocation3 [shape = 'u8[8192]{0}', space=vmem, size = 0x2000, scoped, tag = 'input window, operand 0, single buffered']
    #allocation4 [shape = 's32[1]{0}', space=sflag, size = 0x4, scoped, tag = 'scoped memory for tpu_custom_call.1']
    #allocation5 [shape = 's32[1]{0}', space=sflag, size = 0x4, scoped, tag = 'scoped memory for tpu_custom_call.1']
    #allocation6 [shape = 'u8[262144]{0}', space=vmem, size = 0x40000, scoped, tag = 'input window, operand 1, single buffered']
    #allocation7 [shape = 's32[1]{0}', space=sflag, size = 0x4, scoped, tag = 'scoped memory for tpu_custom_call.1']
    #allocation8 [shape = 'u8[8192]{0}', space=vmem, size = 0x2000, scoped, tag = 'input window, operand 2, single buffered']
    #allocation9 [shape = 'u8[8192]{0}', space=vmem, size = 0x2000, scoped, tag = 'output window, operand 0, single buffered']
    %8 = vsyncpa [#allocation4], 0
    %9 = vsyncpa [#allocation7], 0
    %10 = vsyncpa [#allocation5], 0
    // Predicated region
    $region2: #{tpu_custom_call.1} parent=1 // pred_check
      _
    $region3: #{tpu_custom_call.1} parent=1 // pred_check_branch
      %12 = sbr.rel (0) target = $region5
    $region4: #{tpu_custom_call.1} parent=1 // pred_region
      %s14 = ssub.s32 256, 256
      %15 = vsyncadd [#allocation4], %s14
      %s17 = sshll.u32 [#allocation3], 4
      %s18 = int_to_ptr.vmem [resolvable:$true] %s17
      %20 = dma.hbm_to_vmem [thread:$0]  %s0, 256, %s18, [#allocation4]
    $region5: #{tpu_custom_call.1} parent=1 // pred_fallthru
      _
    // Predicated region
    $region6: #{tpu_custom_call.1} parent=1 // pred_check
      _
    $region7: #{tpu_custom_call.1} parent=1 // pred_check_branch
      %22 = sbr.rel (0) target = $region9
    $region8: #{tpu_custom_call.1} parent=1 // pred_region
      %s24 = ssub.s32 8192, 8192
      %25 = vsyncadd [#allocation7], %s24
      %s26 = sshll.u32 [#allocation6], 4
      %s27 = int_to_ptr.vmem [resolvable:$true] %s26
      %32 = dma.hbm_to_vmem [thread:$0]  %s1, 8192, %s27, [#allocation7], 256, 256, 16
    $region9: #{tpu_custom_call.1} parent=1 // pred_fallthru
      _
    // Predicated region
    $region10: #{tpu_custom_call.1} parent=1 // pred_check
      _
    $region11: #{tpu_custom_call.1} parent=1 // pred_check_branch
      %34 = sbr.rel (0) target = $region13
    $region12: #{tpu_custom_call.1} parent=1 // pred_region
      %s36 = ssub.s32 256, 256
      %37 = vsyncadd [#allocation7], %s36
      %s39 = sshll.u32 [#allocation8], 4
      %s40 = int_to_ptr.vmem [resolvable:$true] %s39
      %42 = dma.hbm_to_vmem [thread:$0]  %s2, 256, %s40, [#allocation7]
    $region13: #{tpu_custom_call.1} parent=1 // pred_fallthru
      _
    // Predicated region
    $region14: #{tpu_custom_call.1} parent=1 // pred_check
      _
    $region15: #{tpu_custom_call.1} parent=1 // pred_check_branch
      %44 = sbr.rel (0) target = $region17
    $region16: #{tpu_custom_call.1} parent=1 // pred_region
      %45 = dma.done [#allocation4], 256
    $region17: #{tpu_custom_call.1} parent=1 // pred_fallthru
      _
    // Predicated region
    $region18: #{tpu_custom_call.1} parent=1 // pred_check
      _
    $region19: #{tpu_custom_call.1} parent=1 // pred_check_branch
      %47 = sbr.rel (0) target = $region21
    $region20: #{tpu_custom_call.1} parent=1 // pred_region
      %48 = dma.done [#allocation7], 8192
    $region21: #{tpu_custom_call.1} parent=1 // pred_fallthru
      _
    // Predicated region
    $region22: #{tpu_custom_call.1} parent=1 // pred_check
      _
    $region23: #{tpu_custom_call.1} parent=1 // pred_check_branch
      %50 = sbr.rel (0) target = $region25
    $region24: #{tpu_custom_call.1} parent=1 // pred_region
      %51 = dma.done [#allocation7], 256
    $region25: #{tpu_custom_call.1} parent=1 // pred_fallthru
      _
    %p52 = scmp.eq.s32.totalorder 0, 0
    // Predicated region
    $region26: #{tpu_custom_call.1} parent=1 // pred_check
      %p53 = pneg %p52
    $region27: #{tpu_custom_call.1} parent=1 // pred_check_branch
      %55 = sbr.rel (%p53) target = $region29
    $region28: #{tpu_custom_call.1} parent=1 // pred_region
      %56 = vst [vmem:[#allocation2] sm:$0xff] 0.0
      %57 = vst [vmem:[#allocation2 + $0x8] sm:$0xff] 0.0
    $region29: #{tpu_custom_call.1} parent=1 // pred_fallthru
      _
    %v58 = vld [vmem:[#allocation2] sm:$0xff]
    %v59 = vld [vmem:[#allocation2 + $0x8] sm:$0xff]
    %v60 = vld [vmem:[#allocation3] sm:$0xff]
    %v61 = vld [vmem:[#allocation3 + $0x8] sm:$0xff]
    %v62 = vld [vmem:[#allocation6] sm:$0xff]
    %v63 = vld [vmem:[#allocation6 + $0x8] sm:$0xff]
    %v64 = vld [vmem:[#allocation6 + $0x10] sm:$0xff]
    %v65 = vld [vmem:[#allocation6 + $0x18] sm:$0xff]
    %v66 = vld [vmem:[#allocation6 + $0x20] sm:$0xff]
    %v67 = vld [vmem:[#allocation6 + $0x28] sm:$0xff]
    %v68 = vld [vmem:[#allocation6 + $0x30] sm:$0xff]
    %v69 = vld [vmem:[#allocation6 + $0x38] sm:$0xff]
    %v70 = vld [vmem:[#allocation6 + $0x40] sm:$0xff]
    %v71 = vld [vmem:[#allocation6 + $0x48] sm:$0xff]
    %v72 = vld [vmem:[#allocation6 + $0x50] sm:$0xff]
    %v73 = vld [vmem:[#allocation6 + $0x58] sm:$0xff]
    %v74 = vld [vmem:[#allocation6 + $0x60] sm:$0xff]
    %v75 = vld [vmem:[#allocation6 + $0x68] sm:$0xff]
    %v76 = vld [vmem:[#allocation6 + $0x70] sm:$0xff]
    %v77 = vld [vmem:[#allocation6 + $0x78] sm:$0xff]
    %v78 = vld [vmem:[#allocation6 + $0x80] sm:$0xff]
    %v79 = vld [vmem:[#allocation6 + $0x88] sm:$0xff]
    %v80 = vld [vmem:[#allocation6 + $0x90] sm:$0xff]
    %v81 = vld [vmem:[#allocation6 + $0x98] sm:$0xff]
    %v82 = vld [vmem:[#allocation6 + $0xa0] sm:$0xff]
    %v83 = vld [vmem:[#allocation6 + $0xa8] sm:$0xff]
    %v84 = vld [vmem:[#allocation6 + $0xb0] sm:$0xff]
    %v85 = vld [vmem:[#allocation6 + $0xb8] sm:$0xff]
    %v86 = vld [vmem:[#allocation6 + $0xc0] sm:$0xff]
    %v87 = vld [vmem:[#allocation6 + $0xc8] sm:$0xff]
    %v88 = vld [vmem:[#allocation6 + $0xd0] sm:$0xff]
    %v89 = vld [vmem:[#allocation6 + $0xd8] sm:$0xff]
    %v90 = vld [vmem:[#allocation6 + $0xe0] sm:$0xff]
    %v91 = vld [vmem:[#allocation6 + $0xe8] sm:$0xff]
    %v92 = vld [vmem:[#allocation6 + $0xf0] sm:$0xff]
    %v93 = vld [vmem:[#allocation6 + $0xf8] sm:$0xff]
    %v94 = vld [vmem:[#allocation6 + $0x100] sm:$0xff]
    %v95 = vld [vmem:[#allocation6 + $0x108] sm:$0xff]
    %v96 = vld [vmem:[#allocation6 + $0x110] sm:$0xff]
    %v97 = vld [vmem:[#allocation6 + $0x118] sm:$0xff]
    %v98 = vld [vmem:[#allocation6 + $0x120] sm:$0xff]
    %v99 = vld [vmem:[#allocation6 + $0x128] sm:$0xff]
    %v100 = vld [vmem:[#allocation6 + $0x130] sm:$0xff]
    %v101 = vld [vmem:[#allocation6 + $0x138] sm:$0xff]
    %v102 = vld [vmem:[#allocation6 + $0x140] sm:$0xff]
    %v103 = vld [vmem:[#allocation6 + $0x148] sm:$0xff]
    %v104 = vld [vmem:[#allocation6 + $0x150] sm:$0xff]
    %v105 = vld [vmem:[#allocation6 + $0x158] sm:$0xff]
    %v106 = vld [vmem:[#allocation6 + $0x160] sm:$0xff]
    %v107 = vld [vmem:[#allocation6 + $0x168] sm:$0xff]
    %v108 = vld [vmem:[#allocation6 + $0x170] sm:$0xff]
    %v109 = vld [vmem:[#allocation6 + $0x178] sm:$0xff]
    %v110 = vld [vmem:[#allocation6 + $0x180] sm:$0xff]
    %v111 = vld [vmem:[#allocation6 + $0x188] sm:$0xff]
    %v112 = vld [vmem:[#allocation6 + $0x190] sm:$0xff]
    %v113 = vld [vmem:[#allocation6 + $0x198] sm:$0xff]
    %v114 = vld [vmem:[#allocation6 + $0x1a0] sm:$0xff]
    %v115 = vld [vmem:[#allocation6 + $0x1a8] sm:$0xff]
    %v116 = vld [vmem:[#allocation6 + $0x1b0] sm:$0xff]
    %v117 = vld [vmem:[#allocation6 + $0x1b8] sm:$0xff]
    %v118 = vld [vmem:[#allocation6 + $0x1c0] sm:$0xff]
    %v119 = vld [vmem:[#allocation6 + $0x1c8] sm:$0xff]
    %v120 = vld [vmem:[#allocation6 + $0x1d0] sm:$0xff]
    %v121 = vld [vmem:[#allocation6 + $0x1d8] sm:$0xff]
    %v122 = vld [vmem:[#allocation6 + $0x1e0] sm:$0xff]
    %v123 = vld [vmem:[#allocation6 + $0x1e8] sm:$0xff]
    %v124 = vld [vmem:[#allocation6 + $0x1f0] sm:$0xff]
    %v125 = vld [vmem:[#allocation6 + $0x1f8] sm:$0xff]
    %126 = vmatprep.subr.mxu0 %v93
    %127 = vmatpush1.msra.mxu0 %v92
    %128 = vmatprep.subr.mxu0 %v91
    %129 = vmatpush1.msra.mxu0 %v90
    %130 = vmatprep.subr.mxu0 %v89
    %131 = vmatpush1.msra.mxu0 %v88
    %132 = vmatprep.subr.mxu0 %v87
    %133 = vmatpush1.msra.mxu0 %v86
    %134 = vmatprep.subr.mxu0 %v85
    %135 = vmatpush1.msra.mxu0 %v84
    %136 = vmatprep.subr.mxu0 %v83
    %137 = vmatpush1.msra.mxu0 %v82
    %138 = vmatprep.subr.mxu0 %v81
    %139 = vmatpush1.msra.mxu0 %v80
    %140 = vmatprep.subr.mxu0 %v79
    %141 = vmatpush1.msra.mxu0 %v78
    %142 = vmatprep.subr.mxu0 %v77
    %143 = vmatpush1.msra.mxu0 %v76
    %144 = vmatprep.subr.mxu0 %v75
    %145 = vmatpush1.msra.mxu0 %v74
    %146 = vmatprep.subr.mxu0 %v73
    %147 = vmatpush1.msra.mxu0 %v72
    %148 = vmatprep.subr.mxu0 %v71
    %149 = vmatpush1.msra.mxu0 %v70
    %150 = vmatprep.subr.mxu0 %v69
    %151 = vmatpush1.msra.mxu0 %v68
    %152 = vmatprep.subr.mxu0 %v67
    %153 = vmatpush1.msra.mxu0 %v66
    %154 = vmatprep.subr.mxu0 %v65
    %155 = vmatpush1.msra.mxu0 %v64
    %156 = vmatprep.subr.mxu0 %v63
    %157 = vmatpush1.msra.mxu0 %v62
    %158 = vmatprep.subr.mxu0 %v125
    %159 = vmatpush2.msra.mxu0 %v124
    %160 = vmatprep.subr.mxu0 %v123
    %161 = vmatpush2.msra.mxu0 %v122
    %162 = vmatprep.subr.mxu0 %v121
    %163 = vmatpush2.msra.mxu0 %v120
    %164 = vmatprep.subr.mxu0 %v119
    %165 = vmatpush2.msra.mxu0 %v118
    %166 = vmatprep.subr.mxu0 %v117
    %167 = vmatpush2.msra.mxu0 %v116
    %168 = vmatprep.subr.mxu0 %v115
    %169 = vmatpush2.msra.mxu0 %v114
    %170 = vmatprep.subr.mxu0 %v113
    %171 = vmatpush2.msra.mxu0 %v112
    %172 = vmatprep.subr.mxu0 %v111
    %173 = vmatpush2.msra.mxu0 %v110
    %174 = vmatprep.subr.mxu0 %v109
    %175 = vmatpush2.msra.mxu0 %v108
    %176 = vmatprep.subr.mxu0 %v107
    %177 = vmatpush2.msra.mxu0 %v106
    %178 = vmatprep.subr.mxu0 %v105
    %179 = vmatpush2.msra.mxu0 %v104
    %180 = vmatprep.subr.mxu0 %v103
    %181 = vmatpush2.msra.mxu0 %v102
    %182 = vmatprep.subr.mxu0 %v101
    %183 = vmatpush2.msra.mxu0 %v100
    %184 = vmatprep.subr.mxu0 %v99
    %185 = vmatpush2.msra.mxu0 %v98
    %186 = vmatprep.subr.mxu0 %v97
    %187 = vmatpush2.msra.mxu0 %v96
    %188 = vmatprep.subr.mxu0 %v95
    %189 = vmatpush2.msra.mxu0 %v94
    %190 = vmatprep.mubr.f32.mxu0 %v61
    %191 = vmatmul.mubr.f32.gmra.mxu0 %v60
    %v192 = vpop.f32.mrf.mxu0
    %v193 = vadd.f32 0.0, %v192
    %v194 = vpop.f32.mrf.mxu0
    %v195 = vadd.f32 0.0, %v194
    %196 = vdwg.mxu0
    %v197 = vadd.f32 %v58, %v193
    %v198 = vadd.f32 %v59, %v195
    %199 = vst [vmem:[#allocation2] sm:$0xff] %v197
    %200 = vst [vmem:[#allocation2 + $0x8] sm:$0xff] %v198
    // Predicated region
    $region30: #{tpu_custom_call.1} parent=1 // pred_check
      %p201 = pneg %p52
    $region31: #{tpu_custom_call.1} parent=1 // pred_check_branch
      %203 = sbr.rel (%p201) target = $region33
    $region32: #{tpu_custom_call.1} parent=1 // pred_region
      %v204 = vld [vmem:[#allocation2] sm:$0xff]
      %v205 = vld [vmem:[#allocation2 + $0x8] sm:$0xff]
      %v206 = vld [vmem:[#allocation8] sm:$0xff]
      %v207 = vld [vmem:[#allocation8 + $0x8] sm:$0xff]
      %v208 = vmul.f32 %v206, 0.1
      %v209 = vmul.f32 %v207, 0.1
      %v210 = vadd.f32 %v204, %v208
      %v211 = vadd.f32 %v205, %v209
      %212 = vst [vmem:[#allocation9] sm:$0xff] %v210
      %213 = vst [vmem:[#allocation9 + $0x8] sm:$0xff] %v211
    $region33: #{tpu_custom_call.1} parent=1 // pred_fallthru
      _
    // Predicated region
    $region34: #{tpu_custom_call.1} parent=1 // pred_check
      _
    $region35: #{tpu_custom_call.1} parent=1 // pred_check_branch
      %215 = sbr.rel (0) target = $region37
    $region36: #{tpu_custom_call.1} parent=1 // pred_region
      %s217 = ssub.s32 256, 256
      %218 = vsyncadd [#allocation5], %s217
      %s220 = sshll.u32 [#allocation9], 4
      %s221 = int_to_ptr.vmem [resolvable:$true] %s220
      %223 = dma.vmem_to_hbm [thread:$0]  %s221, 256, %s3, [#allocation5]
    $region37: #{tpu_custom_call.1} parent=1 // pred_fallthru
      _
    // Predicated region
    $region38: #{tpu_custom_call.1} parent=1 // pred_check
      _
    $region39: #{tpu_custom_call.1} parent=1 // pred_check_branch
      %225 = sbr.rel (0) target = $region41
    $region40: #{tpu_custom_call.1} parent=1 // pred_region
      %226 = dma.done [#allocation5], 256
    $region41: #{tpu_custom_call.1} parent=1 // pred_fallthru
      _
    %227 = vsyncpa [#allocation4], 1
    %228 = vsyncpa [#allocation7], 1
    %229 = vsyncpa [#allocation5], 1

</llo_original>
